<compile_context>
chip_gen: v7x
topology: tpu7x:2x2x1
jax: 0.10.0
libtpu: 0.0.40
codegen_flags: <defaults>
</compile_context>

<pallas_src>
import jax
import jax.numpy as jnp
import numpy as np
from jax import lax
from jax.experimental import pallas as pl
from jax.experimental.pallas import tpu as pltpu

# ----- static problem configuration (small shapes) -----
N, C_IN, H, W = 2, 3, 16, 16

K1, C1_OUT, P1 = 5, 12, 4          # conv1: 3 -> 12, kernel 5, pad 4 (dead, not computed)
K2, C2_OUT, P2 = 4, 23, 2          # conv2: 3 -> 23, kernel 4, pad 2

H2 = H + 2 * P2 - K2 + 1           # 17
W2 = W + 2 * P2 - K2 + 1           # 17
KDIM = C_IN * K2 * K2              # 48   (matmul contraction dim)
MCOLS = N * H2 * W2                # 578  (logical output columns)

MCOLS_PAD = 640                    # 5 * 128 -> lane-dense, unmasked stores
C_PAD = 24                         # 23 -> 24 sublanes (multiple of 8)


def _conv2_sigmoid_kernel(w_ref, p_ref, b_ref, o_ref):
    """One MXU matmul: (C_PAD, KDIM) @ (KDIM, MCOLS_PAD), f32 acc, fused bias+sigmoid."""
    acc = jnp.dot(w_ref[...], p_ref[...], preferred_element_type=jnp.float32)
    o_ref[...] = jax.nn.sigmoid(acc + b_ref[...])   # bias broadcast over lane dim


def model_forward(x_nchw, w1, b1, w2, b2):
    """x_nchw: (N, 3, H, W) float32. Weights in PyTorch layout (C_out, C_in, KH, KW)."""
    del w1, b1  # conv1 output (v1) is never used by the original forward -> dead compute

    # ---- im2col with no large transpose: go channel-first while the tensor is tiny ----
    x_cf = jnp.transpose(x_nchw, (1, 0, 2, 3))                        # (3, N, 16, 16) ~3 KiB
    x_pad = jnp.pad(x_cf, ((0, 0), (0, 0), (P2, P2), (P2, P2)))       # (3, N, 20, 20)
    # shifted windows; stacking on axis=1 puts rows in (c, kh, kw) order directly
    cols = [x_pad[:, :, kh:kh + H2, kw:kw + W2]
            for kh in range(K2) for kw in range(K2)]                  # 16 x (3, N, 17, 17)
    patches = jnp.stack(cols, axis=1)                                 # (3, 16, N, 17, 17)
    patches = patches.reshape(KDIM, MCOLS)                            # (48, 578) free reshape
    patches = jnp.pad(patches, ((0, 0), (0, MCOLS_PAD - MCOLS)))      # (48, 640) lane-dense

    w_mat = jnp.pad(w2.reshape(C2_OUT, KDIM), ((0, C_PAD - C2_OUT), (0, 0)))   # (24, 48)
    b_col = jnp.pad(b2.reshape(C2_OUT, 1), ((0, C_PAD - C2_OUT), (0, 0)))      # (24, 1)

    out = pl.pallas_call(
        _conv2_sigmoid_kernel,
        out_shape=jax.ShapeDtypeStruct((C_PAD, MCOLS_PAD), jnp.float32),  # (24, 640)
        in_specs=[
            pl.BlockSpec(memory_space=pltpu.MemorySpace.VMEM),
            pl.BlockSpec(memory_space=pltpu.MemorySpace.VMEM),
            pl.BlockSpec(memory_space=pltpu.MemorySpace.VMEM),
        ],
        out_specs=pl.BlockSpec(memory_space=pltpu.MemorySpace.VMEM),
        cost_estimate=pl.CostEstimate(
            flops=2 * C_PAD * KDIM * MCOLS_PAD,
            transcendentals=C_PAD * MCOLS_PAD,
            bytes_accessed=(C_PAD * KDIM + KDIM * MCOLS_PAD + C_PAD
                            + C_PAD * MCOLS_PAD) * 4,
        ),
    )(w_mat, patches, b_col)

    # drop padding, (C2_OUT, N*H2*W2) -> (N, C2_OUT, H2, W2)  (PyTorch NCHW output)
    out = out[:C2_OUT, :MCOLS].reshape(C2_OUT, N, H2, W2)
    return jnp.transpose(out, (1, 0, 2, 3))


def _init_conv_params(key, c_out, c_in, k):
    """Deterministic PyTorch-style Conv2d init: U(-1/sqrt(fan_in), 1/sqrt(fan_in))."""
    kw_key, kb_key = jax.random.split(key)
    fan_in = c_in * k * k
    bound = 1.0 / np.sqrt(fan_in)
    w = jax.random.uniform(kw_key, (c_out, c_in, k, k), jnp.float32, -bound, bound)
    b = jax.random.uniform(kb_key, (c_out,), jnp.float32, -bound, bound)
    return w, b


if __name__ == "__main__":
    root = jax.random.PRNGKey(0)
    kx, k1, k2 = jax.random.split(root, 3)

    x = jax.random.normal(kx, (N, C_IN, H, W), jnp.float32)
    w1, b1 = _init_conv_params(k1, C1_OUT, C_IN, K1)   # conv1 params exist but are unused
    w2, b2 = _init_conv_params(k2, C2_OUT, C_IN, K2)

    out = jax.jit(model_forward)(x, w1, b1, w2, b2)
    out = jax.block_until_ready(out)
    assert out.shape == (N, C2_OUT, H2, W2), out.shape

    # pure-JAX f32 reference check (sigmoid(conv2(x)))
    ref = lax.conv_general_dilated(
        x, w2, window_strides=(1, 1), padding=[(P2, P2), (P2, P2)],
        dimension_numbers=("NCHW", "OIHW", "NCHW"),
        precision=lax.Precision.HIGHEST,
    ) + b2[None, :, None, None]
    ref = jax.nn.sigmoid(ref)
    assert jnp.allclose(out, ref, atol=1e-5, rtol=1e-5), float(jnp.max(jnp.abs(out - ref)))

    print("KERNEL_OK")
</pallas_src>

<mosaic_0001>
module attributes {stable_mosaic.version = 11 : i64} {
  func.func @_conv2_sigmoid_kernel(%arg0: memref<24x48xf32, #tpu.memory_space<vmem>>, %arg1: memref<48x640xf32, #tpu.memory_space<vmem>>, %arg2: memref<24x1xf32, #tpu.memory_space<vmem>>, %arg3: memref<24x640xf32, #tpu.memory_space<vmem>>) attributes {dimension_semantics = [], scalar_prefetch = 0 : i64, scratch_operands = 0 : i64, tpu.core_type = #tpu.core_type<tc>} {
    %c0 = arith.constant 0 : index
    %c0_0 = arith.constant 0 : index
    %0 = vector.load %arg0[%c0, %c0_0] : memref<24x48xf32, #tpu.memory_space<vmem>>, vector<24x48xf32>
    %c0_1 = arith.constant 0 : index
    %c0_2 = arith.constant 0 : index
    %1 = vector.load %arg1[%c0_1, %c0_2] : memref<48x640xf32, #tpu.memory_space<vmem>>, vector<48x640xf32>
    %cst = arith.constant dense<0.000000e+00> : vector<24x640xf32>
    %2 = tpu.matmul %0, %1, %cst {dimension_numbers = #tpu.dot_dimension_numbers<[1], [0], [0], [1], [0, 0, 1, 1], [], []>} : vector<24x48xf32>, vector<48x640xf32>, vector<24x640xf32> -> vector<24x640xf32>
    %c0_3 = arith.constant 0 : index
    %c0_4 = arith.constant 0 : index
    %3 = vector.load %arg2[%c0_3, %c0_4] : memref<24x1xf32, #tpu.memory_space<vmem>>, vector<24x1xf32>
    %4 = vector.broadcast %3 : vector<24x1xf32> to vector<24x640xf32>
    %5 = arith.addf %2, %4 : vector<24x640xf32>
    %6 = arith.negf %5 : vector<24x640xf32>
    %7 = math.exp %6 : vector<24x640xf32>
    %cst_5 = arith.constant 1.000000e+00 : f32
    %8 = vector.broadcast %cst_5 : f32 to vector<24x640xf32>
    %9 = arith.addf %8, %7 : vector<24x640xf32>
    %10 = arith.divf %8, %9 : vector<24x640xf32>
    %c0_6 = arith.constant 0 : index
    %c0_7 = arith.constant 0 : index
    %11 = vector.load %arg3[%c0_6, %c0_7] : memref<24x640xf32, #tpu.memory_space<vmem>>, vector<24x640xf32>
    tpu.vector_store %arg3[%c0_6, %c0_7], %10 {strides = array<i32>} : memref<24x640xf32, #tpu.memory_space<vmem>>, vector<24x640xf32>,
    return
  }
}

</mosaic_0001>

<llo_original>
// kernel: model_forward.1
$region0: #{model_forward.1}
  #allocation0 [shape = 'u32[]', space=smem, size = 0x4, offset = 0x4, fixed_abs, tag = 'smem constant byte address 0x4 - core index']
  #allocation1 [shape = 'u32[144,128]{1,0:T(1,128)}', space=vmem, size = 0x12000, scoped, tag = 'internal scratch']
  %s0 = inlined_call_operand.vmem [shape: f32[24,48], index: 0, kind: input, shape index: {}]
  %s1 = inlined_call_operand.vmem [shape: f32[48,640], index: 1, kind: input, shape index: {}]
  %s2 = inlined_call_operand.vmem [shape: f32[24,1], index: 2, kind: input, shape index: {}]
  %s3 = inlined_call_operand.vmem [shape: f32[24,640], index: 3, kind: output, shape index: {}]
  %s4 = sld [smem:[#allocation0]]
  $region22: #{model_forward.1} parent=0
    _
  %s6 = ssub.s32 1, %s4
  %s7 = scalar_select 0, %s6, %s4
  // Predicated region
  $region2: #{model_forward.1} parent=0 // pred_check
    _
  $region3: #{model_forward.1} parent=0 // pred_check_branch
    %9 = sbr.rel (0) target = $region5
  $region4: #{model_forward.1} parent=0 // pred_region
    _
  $region5: #{model_forward.1} parent=0 // pred_fallthru
    _
  // Predicated region
  $region6: #{model_forward.1} parent=0 // pred_check
    _
  $region7: #{model_forward.1} parent=0 // pred_check_branch
    %11 = sbr.rel (0) target = $region9
  $region8: #{model_forward.1} parent=0 // pred_region
    _
  $region9: #{model_forward.1} parent=0 // pred_fallthru
    _
  // Predicated region
  $region10: #{model_forward.1} parent=0 // pred_check
    _
  $region11: #{model_forward.1} parent=0 // pred_check_branch
    %13 = sbr.rel (0) target = $region13
  $region12: #{model_forward.1} parent=0 // pred_region
    _
  $region13: #{model_forward.1} parent=0 // pred_fallthru
    _
  %v14 = vld [vmem:[%s0] sm:$0xff]
  %v15 = vld [vmem:[%s0 + $0x8] sm:$0xff]
  %v16 = vld [vmem:[%s0 + $0x10] sm:$0xff]
  %v17 = vld [vmem:[%s1] sm:$0xff]
  %v18 = vld [vmem:[%s1 + $0x8] sm:$0xff]
  %v19 = vld [vmem:[%s1 + $0x10] sm:$0xff]
  %v20 = vld [vmem:[%s1 + $0x18] sm:$0xff]
  %v21 = vld [vmem:[%s1 + $0x20] sm:$0xff]
  %v22 = vld [vmem:[%s1 + $0x28] sm:$0xff]
  %v23 = vld [vmem:[%s1 + $0x30] sm:$0xff]
  %v24 = vld [vmem:[%s1 + $0x38] sm:$0xff]
  %v25 = vld [vmem:[%s1 + $0x40] sm:$0xff]
  %v26 = vld [vmem:[%s1 + $0x48] sm:$0xff]
  %v27 = vld [vmem:[%s1 + $0x50] sm:$0xff]
  %v28 = vld [vmem:[%s1 + $0x58] sm:$0xff]
  %v29 = vld [vmem:[%s1 + $0x60] sm:$0xff]
  %v30 = vld [vmem:[%s1 + $0x68] sm:$0xff]
  %v31 = vld [vmem:[%s1 + $0x70] sm:$0xff]
  %v32 = vld [vmem:[%s1 + $0x78] sm:$0xff]
  %v33 = vld [vmem:[%s1 + $0x80] sm:$0xff]
  %v34 = vld [vmem:[%s1 + $0x88] sm:$0xff]
  %v35 = vld [vmem:[%s1 + $0x90] sm:$0xff]
  %v36 = vld [vmem:[%s1 + $0x98] sm:$0xff]
  %v37 = vld [vmem:[%s1 + $0xa0] sm:$0xff]
  %v38 = vld [vmem:[%s1 + $0xa8] sm:$0xff]
  %v39 = vld [vmem:[%s1 + $0xb0] sm:$0xff]
  %v40 = vld [vmem:[%s1 + $0xb8] sm:$0xff]
  %v41 = vld [vmem:[%s1 + $0xc0] sm:$0xff]
  %v42 = vld [vmem:[%s1 + $0xc8] sm:$0xff]
  %v43 = vld [vmem:[%s1 + $0xd0] sm:$0xff]
  %v44 = vld [vmem:[%s1 + $0xd8] sm:$0xff]
  %v45 = vld [vmem:[%s1 + $0xe0] sm:$0xff]
  %v46 = vld [vmem:[%s1 + $0xe8] sm:$0xff]
  %v47 = vld [vmem:[%s2] sm:$0xff]
  %v48 = vld [vmem:[%s2 + $0x8] sm:$0xff]
  %v49 = vld [vmem:[%s2 + $0x10] sm:$0xff]
  %51 = vset.pattern.permute.xlu0 0
  %52 = vperm.xlu0 %51, %v47
  %v53 = vpop.permute.xlu0 %52
  %56 = vset.pattern.permute.xlu0 0
  %57 = vperm.xlu0 %56, %v48
  %v58 = vpop.permute.xlu0 %57
  %61 = vset.pattern.permute.xlu0 0
  %62 = vperm.xlu0 %61, %v49
  %v63 = vpop.permute.xlu0 %62
  %vm65 = vcmask 392192
  %v67 = vsel %vm65, %v14, 0
  %v70 = vsel %vm65, %v15, 0
  %v73 = vsel %vm65, %v16, 0
  %75 = vmatprep.subr.mxu0 %v18
  %76 = vmatpush1.msra.mxu0 %v17
  %77 = vmatprep.subr.mxu0 %v23
  %78 = vmatpush1.msra.mxu0 %v22
  %79 = vmatprep.subr.mxu0 %v28
  %80 = vmatpush1.msra.mxu0 %v27
  %81 = vmatprep.subr.mxu0 %v33
  %82 = vmatpush1.msra.mxu0 %v32
  %83 = vmatprep.subr.mxu0 %v38
  %84 = vmatpush1.msra.mxu0 %v37
  %85 = vmatprep.subr.mxu0 %v43
  %86 = vmatpush1.msra.mxu0 %v42
  %87 = vmatprep.subr.mxu0 0.0
  %88 = vmatpush1.msra.mxu0 0.0
  %89 = vmatprep.subr.mxu0 0.0
  %90 = vmatpush1.msra.mxu0 0.0
  %91 = vmatprep.subr.mxu0 0.0
  %92 = vmatpush1.msra.mxu0 0.0
  %93 = vmatprep.subr.mxu0 0.0
  %94 = vmatpush1.msra.mxu0 0.0
  %95 = vmatprep.subr.mxu0 0.0
  %96 = vmatpush1.msra.mxu0 0.0
  %97 = vmatprep.subr.mxu0 0.0
  %98 = vmatpush1.msra.mxu0 0.0
  %99 = vmatprep.subr.mxu0 0.0
  %100 = vmatpush1.msra.mxu0 0.0
  %101 = vmatprep.subr.mxu0 0.0
  %102 = vmatpush1.msra.mxu0 0.0
  %103 = vmatprep.subr.mxu0 0.0
  %104 = vmatpush1.msra.mxu0 0.0
  %105 = vmatprep.subr.mxu0 0.0
  %106 = vmatpush1.msra.mxu0 0.0
  %107 = vmatprep.subr.mxu0 0.0
  %108 = vmatpush1.msra.mxu0 0.0
  %109 = vmatprep.subr.mxu0 0.0
  %110 = vmatpush1.msra.mxu0 0.0
  %111 = vmatprep.subr.mxu0 0.0
  %112 = vmatpush1.msra.mxu0 0.0
  %113 = vmatprep.subr.mxu0 0.0
  %114 = vmatpush1.msra.mxu0 0.0
  %115 = vmatprep.subr.mxu0 0.0
  %116 = vmatpush1.msra.mxu0 0.0
  %117 = vmatprep.subr.mxu0 0.0
  %118 = vmatpush1.msra.mxu0 0.0
  %119 = vmatprep.subr.mxu0 0.0
  %120 = vmatpush1.msra.mxu0 0.0
  %121 = vmatprep.subr.mxu0 0.0
  %122 = vmatpush1.msra.mxu0 0.0
  %123 = vmatprep.subr.mxu0 0.0
  %124 = vmatpush1.msra.mxu0 0.0
  %125 = vmatprep.subr.mxu0 0.0
  %126 = vmatpush1.msra.mxu0 0.0
  %127 = vmatprep.subr.mxu0 0.0
  %128 = vmatpush1.msra.mxu0 0.0
  %129 = vmatprep.subr.mxu0 0.0
  %130 = vmatpush1.msra.mxu0 0.0
  %131 = vmatprep.subr.mxu0 0.0
  %132 = vmatpush1.msra.mxu0 0.0
  %133 = vmatprep.subr.mxu0 0.0
  %134 = vmatpush1.msra.mxu0 0.0
  %135 = vmatprep.subr.mxu0 0.0
  %136 = vmatpush1.msra.mxu0 0.0
  %137 = vmatprep.subr.mxu0 0.0
  %138 = vmatpush1.msra.mxu0 0.0
  %139 = vmatprep.mubr.f32.mxu0 0.0
  %140 = vmatmul.mubr.f32.gmra.mrb[0].mxu0 %v67
  %v141 = vpop.f32.mrb[0].mxu0
  %v142 = vadd.f32 %v53, %v141
  %v143 = vpop.f32.mrb[0].mxu0
  %v144 = vadd.f32 %v53, %v143
  %145 = vmatprep.mubr.f32.mxu0 0.0
  %146 = vmatmul.mubr.f32.gmra.mrb[0].mxu0 %v70
  %v147 = vpop.f32.mrb[0].mxu0
  %v148 = vadd.f32 %v58, %v147
  %v149 = vpop.f32.mrb[0].mxu0
  %v150 = vadd.f32 %v58, %v149
  %151 = vmatprep.mubr.f32.mxu0 0.0
  %152 = vmatmul.mubr.f32.gmra.mrb[0].mxu0 %v73
  %v153 = vpop.f32.mrb[0].mxu0
  %v154 = vadd.f32 %v63, %v153
  %v155 = vpop.f32.mrb[0].mxu0
  %v156 = vadd.f32 %v63, %v155
  %157 = vdwg.mxu0
  %158 = vmatprep.subr.mxu0 %v20
  %159 = vmatpush1.msra.mxu0 %v19
  %160 = vmatprep.subr.mxu0 %v25
  %161 = vmatpush1.msra.mxu0 %v24
  %162 = vmatprep.subr.mxu0 %v30
  %163 = vmatpush1.msra.mxu0 %v29
  %164 = vmatprep.subr.mxu0 %v35
  %165 = vmatpush1.msra.mxu0 %v34
  %166 = vmatprep.subr.mxu0 %v40
  %167 = vmatpush1.msra.mxu0 %v39
  %168 = vmatprep.subr.mxu0 %v45
  %169 = vmatpush1.msra.mxu0 %v44
  %170 = vmatprep.subr.mxu0 0.0
  %171 = vmatpush1.msra.mxu0 0.0
  %172 = vmatprep.subr.mxu0 0.0
  %173 = vmatpush1.msra.mxu0 0.0
  %174 = vmatprep.subr.mxu0 0.0
  %175 = vmatpush1.msra.mxu0 0.0
  %176 = vmatprep.subr.mxu0 0.0
  %177 = vmatpush1.msra.mxu0 0.0
  %178 = vmatprep.subr.mxu0 0.0
  %179 = vmatpush1.msra.mxu0 0.0
  %180 = vmatprep.subr.mxu0 0.0
  %181 = vmatpush1.msra.mxu0 0.0
  %182 = vmatprep.subr.mxu0 0.0
  %183 = vmatpush1.msra.mxu0 0.0
  %184 = vmatprep.subr.mxu0 0.0
  %185 = vmatpush1.msra.mxu0 0.0
  %186 = vmatprep.subr.mxu0 0.0
  %187 = vmatpush1.msra.mxu0 0.0
  %188 = vmatprep.subr.mxu0 0.0
  %189 = vmatpush1.msra.mxu0 0.0
  %190 = vmatprep.subr.mxu0 0.0
  %191 = vmatpush1.msra.mxu0 0.0
  %192 = vmatprep.subr.mxu0 0.0
  %193 = vmatpush1.msra.mxu0 0.0
  %194 = vmatprep.subr.mxu0 0.0
  %195 = vmatpush1.msra.mxu0 0.0
  %196 = vmatprep.subr.mxu0 0.0
  %197 = vmatpush1.msra.mxu0 0.0
  %198 = vmatprep.subr.mxu0 0.0
  %199 = vmatpush1.msra.mxu0 0.0
  %200 = vmatprep.subr.mxu0 0.0
  %201 = vmatpush1.msra.mxu0 0.0
  %202 = vmatprep.subr.mxu0 0.0
  %203 = vmatpush1.msra.mxu0 0.0
  %204 = vmatprep.subr.mxu0 0.0
  %205 = vmatpush1.msra.mxu0 0.0
  %206 = vmatprep.subr.mxu0 0.0
  %207 = vmatpush1.msra.mxu0 0.0
  %208 = vmatprep.subr.mxu0 0.0
  %209 = vmatpush1.msra.mxu0 0.0
  %210 = vmatprep.subr.mxu0 0.0
  %211 = vmatpush1.msra.mxu0 0.0
  %212 = vmatprep.subr.mxu0 0.0
  %213 = vmatpush1.msra.mxu0 0.0
  %214 = vmatprep.subr.mxu0 0.0
  %215 = vmatpush1.msra.mxu0 0.0
  %216 = vmatprep.subr.mxu0 0.0
  %217 = vmatpush1.msra.mxu0 0.0
  %218 = vmatprep.subr.mxu0 0.0
  %219 = vmatpush1.msra.mxu0 0.0
  %220 = vmatprep.subr.mxu0 0.0
  %221 = vmatpush1.msra.mxu0 0.0
  %222 = vmatprep.mubr.f32.mxu0 0.0
  %223 = vmatmul.mubr.f32.gmra.mrb[0].mxu0 %v67
  %v224 = vpop.f32.mrb[0].mxu0
  %v225 = vadd.f32 %v53, %v224
  %v226 = vpop.f32.mrb[0].mxu0
  %v227 = vadd.f32 %v53, %v226
  %228 = vmatprep.mubr.f32.mxu0 0.0
  %229 = vmatmul.mubr.f32.gmra.mrb[0].mxu0 %v70
  %v230 = vpop.f32.mrb[0].mxu0
  %v231 = vadd.f32 %v58, %v230
  %v232 = vpop.f32.mrb[0].mxu0
  %v233 = vadd.f32 %v58, %v232
  %234 = vmatprep.mubr.f32.mxu0 0.0
  %235 = vmatmul.mubr.f32.gmra.mrb[0].mxu0 %v73
  %v236 = vpop.f32.mrb[0].mxu0
  %v237 = vadd.f32 %v63, %v236
  %v238 = vpop.f32.mrb[0].mxu0
  %v239 = vadd.f32 %v63, %v238
  %240 = vdwg.mxu0
  %241 = vmatprep.subr.mxu0 0.0
  %242 = vmatpush1.msra.mxu0 %v21
  %243 = vmatprep.subr.mxu0 0.0
  %244 = vmatpush1.msra.mxu0 %v26
  %245 = vmatprep.subr.mxu0 0.0
  %246 = vmatpush1.msra.mxu0 %v31
  %247 = vmatprep.subr.mxu0 0.0
  %248 = vmatpush1.msra.mxu0 %v36
  %249 = vmatprep.subr.mxu0 0.0
  %250 = vmatpush1.msra.mxu0 %v41
  %251 = vmatprep.subr.mxu0 0.0
  %252 = vmatpush1.msra.mxu0 %v46
  %253 = vmatprep.subr.mxu0 0.0
  %254 = vmatpush1.msra.mxu0 0.0
  %255 = vmatprep.subr.mxu0 0.0
  %256 = vmatpush1.msra.mxu0 0.0
  %257 = vmatprep.subr.mxu0 0.0
  %258 = vmatpush1.msra.mxu0 0.0
  %259 = vmatprep.subr.mxu0 0.0
  %260 = vmatpush1.msra.mxu0 0.0
  %261 = vmatprep.subr.mxu0 0.0
  %262 = vmatpush1.msra.mxu0 0.0
  %263 = vmatprep.subr.mxu0 0.0
  %264 = vmatpush1.msra.mxu0 0.0
  %265 = vmatprep.subr.mxu0 0.0
  %266 = vmatpush1.msra.mxu0 0.0
  %267 = vmatprep.subr.mxu0 0.0
  %268 = vmatpush1.msra.mxu0 0.0
  %269 = vmatprep.subr.mxu0 0.0
  %270 = vmatpush1.msra.mxu0 0.0
  %271 = vmatprep.subr.mxu0 0.0
  %272 = vmatpush1.msra.mxu0 0.0
  %273 = vmatprep.subr.mxu0 0.0
  %274 = vmatpush1.msra.mxu0 0.0
  %275 = vmatprep.subr.mxu0 0.0
  %276 = vmatpush1.msra.mxu0 0.0
  %277 = vmatprep.subr.mxu0 0.0
  %278 = vmatpush1.msra.mxu0 0.0
  %279 = vmatprep.subr.mxu0 0.0
  %280 = vmatpush1.msra.mxu0 0.0
  %281 = vmatprep.subr.mxu0 0.0
  %282 = vmatpush1.msra.mxu0 0.0
  %283 = vmatprep.subr.mxu0 0.0
  %284 = vmatpush1.msra.mxu0 0.0
  %285 = vmatprep.subr.mxu0 0.0
  %286 = vmatpush1.msra.mxu0 0.0
  %287 = vmatprep.subr.mxu0 0.0
  %288 = vmatpush1.msra.mxu0 0.0
  %289 = vmatprep.subr.mxu0 0.0
  %290 = vmatpush1.msra.mxu0 0.0
  %291 = vmatprep.subr.mxu0 0.0
  %292 = vmatpush1.msra.mxu0 0.0
  %293 = vmatprep.subr.mxu0 0.0
  %294 = vmatpush1.msra.mxu0 0.0
  %295 = vmatprep.subr.mxu0 0.0
  %296 = vmatpush1.msra.mxu0 0.0
  %297 = vmatprep.subr.mxu0 0.0
  %298 = vmatpush1.msra.mxu0 0.0
  %299 = vmatprep.subr.mxu0 0.0
  %300 = vmatpush1.msra.mxu0 0.0
  %301 = vmatprep.subr.mxu0 0.0
  %302 = vmatpush1.msra.mxu0 0.0
  %303 = vmatprep.subr.mxu0 0.0
  %304 = vmatpush1.msra.mxu0 0.0
  %305 = vmatprep.mubr.f32.mxu0 0.0
  %306 = vmatmul.mubr.f32.gmra.mrb[0].mxu0 %v67
  %v307 = vpop.f32.mrb[0].mxu0
  %v308 = vadd.f32 %v53, %v307
  %v309 = vpop.f32.mrb[0].mxu0
  %310 = vmatprep.mubr.f32.mxu0 0.0
  %311 = vmatmul.mubr.f32.gmra.mrb[0].mxu0 %v70
  %v312 = vpop.f32.mrb[0].mxu0
  %v313 = vadd.f32 %v58, %v312
  %v314 = vpop.f32.mrb[0].mxu0
  %315 = vmatprep.mubr.f32.mxu0 0.0
  %316 = vmatmul.mubr.f32.gmra.mrb[0].mxu0 %v73
  %v317 = vpop.f32.mrb[0].mxu0
  %v318 = vadd.f32 %v63, %v317
  %v319 = vpop.f32.mrb[0].mxu0
  %320 = vdwg.mxu0
  %v321 = vxor.u32 %v142, 2147483648
  %v322 = vxor.u32 %v144, 2147483648
  %v323 = vxor.u32 %v225, 2147483648
  %v324 = vxor.u32 %v227, 2147483648
  %v325 = vxor.u32 %v308, 2147483648
  %v326 = vxor.u32 %v148, 2147483648
  %v327 = vxor.u32 %v150, 2147483648
  %v328 = vxor.u32 %v231, 2147483648
  %v329 = vxor.u32 %v233, 2147483648
  %v330 = vxor.u32 %v313, 2147483648
  %v331 = vxor.u32 %v154, 2147483648
  %v332 = vxor.u32 %v156, 2147483648
  %v333 = vxor.u32 %v237, 2147483648
  %v334 = vxor.u32 %v239, 2147483648
  %v335 = vxor.u32 %v318, 2147483648
  %v336 = vmul.f32 %v321, 1.442695
  %v337 = vpow.pop %v336
  %v338 = vmul.f32 %v322, 1.442695
  %v339 = vpow.pop %v338
  %v340 = vmul.f32 %v323, 1.442695
  %v341 = vpow.pop %v340
  %v342 = vmul.f32 %v324, 1.442695
  %v343 = vpow.pop %v342
  %v344 = vmul.f32 %v325, 1.442695
  %v345 = vpow.pop %v344
  %v346 = vmul.f32 %v326, 1.442695
  %v347 = vpow.pop %v346
  %v348 = vmul.f32 %v327, 1.442695
  %v349 = vpow.pop %v348
  %v350 = vmul.f32 %v328, 1.442695
  %v351 = vpow.pop %v350
  %v352 = vmul.f32 %v329, 1.442695
  %v353 = vpow.pop %v352
  %v354 = vmul.f32 %v330, 1.442695
  %v355 = vpow.pop %v354
  %v356 = vmul.f32 %v331, 1.442695
  %v357 = vpow.pop %v356
  %v358 = vmul.f32 %v332, 1.442695
  %v359 = vpow.pop %v358
  %v360 = vmul.f32 %v333, 1.442695
  %v361 = vpow.pop %v360
  %v362 = vmul.f32 %v334, 1.442695
  %v363 = vpow.pop %v362
  %v364 = vmul.f32 %v335, 1.442695
  %v365 = vpow.pop %v364
  %v366 = vadd.f32 %v337, 1.0
  %v367 = vadd.f32 %v339, 1.0
  %v368 = vadd.f32 %v341, 1.0
  %v369 = vadd.f32 %v343, 1.0
  %v370 = vadd.f32 %v345, 1.0
  %v371 = vadd.f32 %v347, 1.0
  %v372 = vadd.f32 %v349, 1.0
  %v373 = vadd.f32 %v351, 1.0
  %v374 = vadd.f32 %v353, 1.0
  %v375 = vadd.f32 %v355, 1.0
  %v376 = vadd.f32 %v357, 1.0
  %v377 = vadd.f32 %v359, 1.0
  %v378 = vadd.f32 %v361, 1.0
  %v379 = vadd.f32 %v363, 1.0
  %v380 = vadd.f32 %v365, 1.0
  %v381 = vrcp.pop %v366
  %v382 = vmul.f32 1.0, %v381
  %v383 = vrcp.pop %v367
  %v384 = vmul.f32 1.0, %v383
  %v385 = vrcp.pop %v368
  %v386 = vmul.f32 1.0, %v385
  %v387 = vrcp.pop %v369
  %v388 = vmul.f32 1.0, %v387
  %v389 = vrcp.pop %v370
  %v390 = vmul.f32 1.0, %v389
  %v391 = vrcp.pop %v371
  %v392 = vmul.f32 1.0, %v391
  %v393 = vrcp.pop %v372
  %v394 = vmul.f32 1.0, %v393
  %v395 = vrcp.pop %v373
  %v396 = vmul.f32 1.0, %v395
  %v397 = vrcp.pop %v374
  %v398 = vmul.f32 1.0, %v397
  %v399 = vrcp.pop %v375
  %v400 = vmul.f32 1.0, %v399
  %v401 = vrcp.pop %v376
  %v402 = vmul.f32 1.0, %v401
  %v403 = vrcp.pop %v377
  %v404 = vmul.f32 1.0, %v403
  %v405 = vrcp.pop %v378
  %v406 = vmul.f32 1.0, %v405
  %v407 = vrcp.pop %v379
  %v408 = vmul.f32 1.0, %v407
  %v409 = vrcp.pop %v380
  %v410 = vmul.f32 1.0, %v409
  %411 = vst [vmem:[%s3] sm:$0xff] %v382
  %412 = vst [vmem:[%s3 + $0x8] sm:$0xff] %v384
  %413 = vst [vmem:[%s3 + $0x10] sm:$0xff] %v386
  %414 = vst [vmem:[%s3 + $0x18] sm:$0xff] %v388
  %415 = vst [vmem:[%s3 + $0x20] sm:$0xff] %v390
  %416 = vst [vmem:[%s3 + $0x28] sm:$0xff] %v392
  %417 = vst [vmem:[%s3 + $0x30] sm:$0xff] %v394
  %418 = vst [vmem:[%s3 + $0x38] sm:$0xff] %v396
  %419 = vst [vmem:[%s3 + $0x40] sm:$0xff] %v398
  %420 = vst [vmem:[%s3 + $0x48] sm:$0xff] %v400
  %421 = vst [vmem:[%s3 + $0x50] sm:$0xff] %v402
  %422 = vst [vmem:[%s3 + $0x58] sm:$0xff] %v404
  %423 = vst [vmem:[%s3 + $0x60] sm:$0xff] %v406
  %424 = vst [vmem:[%s3 + $0x68] sm:$0xff] %v408
  %425 = vst [vmem:[%s3 + $0x70] sm:$0xff] %v410
  // Predicated region
  $region14: #{model_forward.1} parent=0 // pred_check
    _
  $region15: #{model_forward.1} parent=0 // pred_check_branch
    %427 = sbr.rel (0) target = $region17
  $region16: #{model_forward.1} parent=0 // pred_region
    _
  $region17: #{model_forward.1} parent=0 // pred_fallthru
    _
  // Predicated region
  $region18: #{model_forward.1} parent=0 // pred_check
    _
  $region19: #{model_forward.1} parent=0 // pred_check_branch
    %429 = sbr.rel (0) target = $region21
  $region20: #{model_forward.1} parent=0 // pred_region
    _
  $region21: #{model_forward.1} parent=0 // pred_fallthru
    _

</llo_original>
